<compile_context>
chip_gen: v7x
topology: tpu7x:2x2x1
jax: 0.10.0
libtpu: 0.0.40
codegen_flags: <defaults>
</compile_context>

<pallas_src>
import jax
import jax.numpy as jnp
from jax import lax
from jax.experimental import pallas as pl
from jax.experimental.pallas import tpu as pltpu

EPSILON = 1e-12  # module default (epsilon or 1e-12)


def _sublane_pack(dtype):
    """Sublane packing factor for a dtype: f32 -> 8, bf16 -> 16, int8/fp8 -> 32."""
    itemsize = jnp.dtype(dtype).itemsize
    return max(8, 32 // max(1, itemsize))


def _choose_row_tile(rows, h_padded, dtype, target_block_bytes, max_rows_tile=4096):
    """Pick a row tile so one (row_tile, h_padded) block is ~target_block_bytes."""
    pack = _sublane_pack(dtype)
    itemsize = jnp.dtype(dtype).itemsize
    rt = target_block_bytes // max(1, h_padded * itemsize)
    rt = (rt // pack) * pack
    rt = max(pack, min(rt, max_rows_tile))
    # No point tiling beyond the (pack-rounded) number of actual rows.
    rows_min = ((rows + pack - 1) // pack) * pack
    rt = min(rt, rows_min)
    return max(rt, pack)


def _make_layernorm_kernel(h_actual, h_padded, epsilon):
    """Build a kernel closed over static H so padded lanes can be masked."""
    need_mask = h_padded != h_actual
    inv_h = 1.0 / float(h_actual)

    def kernel(x_ref, gamma_ref, beta_ref, o_ref):
        # x_ref: (TR, Hp) tile of rows; gamma/beta: (1, Hp) f32, resident.
        x = x_ref[...].astype(jnp.float32)

        if need_mask:
            lane = lax.broadcasted_iota(jnp.int32, x.shape, dimension=1)
            mask = lane < h_actual
            xm = jnp.where(mask, x, 0.0)
        else:
            xm = x

        # center
        mean = jnp.sum(xm, axis=-1, keepdims=True) * inv_h
        xc = x - mean
        if need_mask:
            xc = jnp.where(mask, xc, 0.0)

        # scale
        var = jnp.sum(xc * xc, axis=-1, keepdims=True) * inv_h
        inv_std = lax.rsqrt(var + epsilon)  # EUP; free next to the mem-bound DMAs
        out = xc * inv_std * gamma_ref[...] + beta_ref[...]

        o_ref[...] = out.astype(o_ref.dtype)

    return kernel


def layer_norm(x, gamma, beta, *, epsilon=EPSILON, row_tile=None,
               target_block_bytes=2 * 1024 * 1024):
    """x: (..., H) float array; gamma, beta: (H,).  Returns same shape/dtype as x."""
    orig_shape = x.shape
    H = orig_shape[-1]
    rows = 1
    for d in orig_shape[:-1]:
        rows *= d

    # Lane-dense block width for the hidden dimension (the full row must live
    # in one block so the reduction is local).
    Hp = ((H + 127) // 128) * 128

    # Row tile: large enough to amortize per-step overhead, aligned to the
    # dtype's sublane packing, small enough for scoped VMEM on all chips.
    if row_tile is None:
        row_tile = _choose_row_tile(rows, Hp, x.dtype, target_block_bytes)
    pack = _sublane_pack(x.dtype)
    row_tile = max(pack, (row_tile // pack) * pack)

    # Flatten leading dims (free, row-major layout unchanged).  No padding of
    # the activation tensor: partial edge blocks (rows % row_tile != 0,
    # H < Hp) are handled by Pallas + the in-kernel lane mask.
    x2 = x.reshape(rows, H)

    # Pre-cast params to f32 once; lane-pad them (tiny) so masked-out lanes of
    # the block never read stale VMEM through gamma/beta.
    gamma2 = gamma.astype(jnp.float32).reshape(1, H)
    beta2 = beta.astype(jnp.float32).reshape(1, H)
    if Hp != H:
        gamma2 = jnp.pad(gamma2, ((0, 0), (0, Hp - H)))
        beta2 = jnp.pad(beta2, ((0, 0), (0, Hp - H)))

    grid = (pl.cdiv(rows, row_tile),)
    kernel = _make_layernorm_kernel(H, Hp, float(epsilon))

    out2 = pl.pallas_call(
        kernel,
        out_shape=jax.ShapeDtypeStruct((rows, H), x.dtype),
        grid_spec=pltpu.PrefetchScalarGridSpec(
            num_scalar_prefetch=0,
            grid=grid,
            in_specs=[
                pl.BlockSpec((row_tile, Hp), lambda i: (i, 0)),  # x rows tile
                pl.BlockSpec((1, Hp), lambda i: (0, 0)),          # gamma (broadcast)
                pl.BlockSpec((1, Hp), lambda i: (0, 0)),          # beta  (broadcast)
            ],
            out_specs=pl.BlockSpec((row_tile, Hp), lambda i: (i, 0)),
        ),
        compiler_params=pltpu.CompilerParams(
            dimension_semantics=("parallel",),       # megacore sharding on v7x
            vmem_limit_bytes=32 * 1024 * 1024,       # raise v5e's 16 MiB default,
                                                     # still safe on v7x (64 MiB phys)
        ),
    )(x2, gamma2, beta2)

    return out2.reshape(orig_shape)


def layer_norm_ref(x, gamma, beta, epsilon=EPSILON):
    """Pure-JAX reference mirroring the PyTorch module's forward."""
    x = x.astype(jnp.float32)
    mean = jnp.mean(x, axis=-1, keepdims=True)
    out = x - mean
    var = jnp.mean(out**2, axis=-1, keepdims=True)
    std = jnp.sqrt(var + epsilon)
    out = out / std
    out = out * gamma
    out = out + beta
    return out


if __name__ == "__main__":
    key = jax.random.PRNGKey(0)

    # Primary shapes consistent with the module: batch=2, seq=8, hidden=32.
    B, S, H = 2, 8, 32
    x = jax.random.normal(key, (B, S, H), dtype=jnp.float32)

    # Parameters exactly as in LayerNorm.__init__: beta = zeros, gamma = ones.
    gamma = jnp.ones((H,), dtype=jnp.float32)
    beta = jnp.zeros((H,), dtype=jnp.float32)

    out = layer_norm(x, gamma, beta)
    out = jax.block_until_ready(out)

    ref = layer_norm_ref(x, gamma, beta)
    assert out.shape == x.shape
    assert jnp.allclose(out, ref, atol=1e-5, rtol=1e-5), "mismatch vs reference"

    # Extra check: rows not divisible by the row tile and H not a multiple of
    # 128 (exercises the unpadded partial-block + lane-mask path).
    B2, S2, H2 = 3, 5, 200
    key2, key3 = jax.random.split(key)
    x2 = jax.random.normal(key2, (B2, S2, H2), dtype=jnp.float32)
    gamma2 = 1.0 + 0.1 * jax.random.normal(key3, (H2,), dtype=jnp.float32)
    beta2 = 0.05 * jnp.ones((H2,), dtype=jnp.float32)

    out2 = jax.block_until_ready(layer_norm(x2, gamma2, beta2))
    ref2 = layer_norm_ref(x2, gamma2, beta2)
    assert out2.shape == x2.shape
    assert jnp.allclose(out2, ref2, atol=1e-5, rtol=1e-5), "mismatch vs reference (partial-block path)"

    print("KERNEL_OK")
</pallas_src>

<mosaic_0001>
module attributes {stable_mosaic.version = 11 : i64} {
  func.func @kernel(%arg0: i32, %arg1: memref<16x128xf32, #tpu.memory_space<vmem>>, %arg2: memref<1x128xf32, #tpu.memory_space<vmem>>, %arg3: memref<1x128xf32, #tpu.memory_space<vmem>>, %arg4: memref<16x128xf32, #tpu.memory_space<vmem>>) attributes {dimension_semantics = [#tpu.dimension_semantics<parallel>], iteration_bounds = array<i64: 1>, scalar_prefetch = 0 : i64, scratch_operands = 0 : i64, tpu.core_type = #tpu.core_type<tc>, window_params = [{transform_indices = @transform_0, window_bounds = array<i64: 16, 128>}, {pipeline_mode = #tpu.pipeline_mode<synchronous>, transform_indices = @transform_1, window_bounds = array<i64: 1, 128>}, {pipeline_mode = #tpu.pipeline_mode<synchronous>, transform_indices = @transform_2, window_bounds = array<i64: 1, 128>}, {transform_indices = @transform_3, window_bounds = array<i64: 16, 128>}]} {
    %c0 = arith.constant 0 : index
    %c0_0 = arith.constant 0 : index
    %0 = vector.load %arg1[%c0, %c0_0] : memref<16x128xf32, #tpu.memory_space<vmem>>, vector<16x128xf32>
    %1 = tpu.iota {dimensions = array<i32: 1>} : vector<16x128xi32>
    %c32_i32 = arith.constant 32 : i32
    %2 = vector.broadcast %c32_i32 : i32 to vector<16x128xi32>
    %3 = arith.cmpi slt, %1, %2 : vector<16x128xi32>
    %cst = arith.constant 0.000000e+00 : f32
    %4 = vector.broadcast %cst : f32 to vector<16x128xf32>
    %5 = arith.select %3, %0, %4 : vector<16x128xi1>, vector<16x128xf32>
    %cst_1 = arith.constant dense<0.000000e+00> : vector<16xf32>
    %6 = vector.multi_reduction <add>, %5, %cst_1 [1] : vector<16x128xf32> to vector<16xf32>
    %7 = vector.shape_cast %6 : vector<16xf32> to vector<16x1xf32>
    %cst_2 = arith.constant 3.125000e-02 : f32
    %8 = vector.broadcast %cst_2 : f32 to vector<16x1xf32>
    %9 = arith.mulf %7, %8 : vector<16x1xf32>
    %10 = vector.broadcast %9 : vector<16x1xf32> to vector<16x128xf32>
    %11 = arith.subf %0, %10 : vector<16x128xf32>
    %cst_3 = arith.constant 0.000000e+00 : f32
    %12 = vector.broadcast %cst_3 : f32 to vector<16x128xf32>
    %13 = arith.select %3, %11, %12 : vector<16x128xi1>, vector<16x128xf32>
    %14 = arith.mulf %13, %13 : vector<16x128xf32>
    %cst_4 = arith.constant dense<0.000000e+00> : vector<16xf32>
    %15 = vector.multi_reduction <add>, %14, %cst_4 [1] : vector<16x128xf32> to vector<16xf32>
    %16 = vector.shape_cast %15 : vector<16xf32> to vector<16x1xf32>
    %cst_5 = arith.constant 3.125000e-02 : f32
    %17 = vector.broadcast %cst_5 : f32 to vector<16x1xf32>
    %18 = arith.mulf %16, %17 : vector<16x1xf32>
    %cst_6 = arith.constant 9.99999996E-13 : f32
    %19 = vector.broadcast %cst_6 : f32 to vector<16x1xf32>
    %20 = arith.addf %18, %19 : vector<16x1xf32>
    %21 = math.rsqrt %20 : vector<16x1xf32>
    %22 = vector.broadcast %21 : vector<16x1xf32> to vector<16x128xf32>
    %23 = arith.mulf %13, %22 : vector<16x128xf32>
    %c0_7 = arith.constant 0 : index
    %c0_8 = arith.constant 0 : index
    %24 = vector.load %arg2[%c0_7, %c0_8] : memref<1x128xf32, #tpu.memory_space<vmem>>, vector<1x128xf32>
    %25 = vector.broadcast %24 : vector<1x128xf32> to vector<16x128xf32>
    %26 = arith.mulf %23, %25 : vector<16x128xf32>
    %c0_9 = arith.constant 0 : index
    %c0_10 = arith.constant 0 : index
    %27 = vector.load %arg3[%c0_9, %c0_10] : memref<1x128xf32, #tpu.memory_space<vmem>>, vector<1x128xf32>
    %28 = vector.broadcast %27 : vector<1x128xf32> to vector<16x128xf32>
    %29 = arith.addf %26, %28 : vector<16x128xf32>
    %c0_11 = arith.constant 0 : index
    %c0_12 = arith.constant 0 : index
    %30 = vector.load %arg4[%c0_11, %c0_12] : memref<16x128xf32, #tpu.memory_space<vmem>>, vector<16x128xf32>
    tpu.vector_store %arg4[%c0_11, %c0_12], %29 {strides = array<i32>} : memref<16x128xf32, #tpu.memory_space<vmem>>, vector<16x128xf32>,
    return
  }
  func.func @transform_0(%arg0: i32) -> (i32, i32) {
    %c0_i32 = arith.constant 0 : i32
    %c0_i32_0 = arith.constant 0 : i32
    return %arg0, %c0_i32 : i32, i32
  }
  func.func @transform_1(%arg0: i32) -> (i32, i32) {
    %c0_i32 = arith.constant 0 : i32
    %c0_i32_0 = arith.constant 0 : i32
    %c0_i32_1 = arith.constant 0 : i32
    return %c0_i32, %c0_i32_0 : i32, i32
  }
  func.func @transform_2(%arg0: i32) -> (i32, i32) {
    %c0_i32 = arith.constant 0 : i32
    %c0_i32_0 = arith.constant 0 : i32
    %c0_i32_1 = arith.constant 0 : i32
    return %c0_i32, %c0_i32_0 : i32, i32
  }
  func.func @transform_3(%arg0: i32) -> (i32, i32) {
    %c0_i32 = arith.constant 0 : i32
    %c0_i32_0 = arith.constant 0 : i32
    return %arg0, %c0_i32 : i32, i32
  }
}

</mosaic_0001>

<llo_original>
// kernel: tpu_custom_call.1
$region0: #{tpu_custom_call.1}
  #allocation0 [shape = 'u32[]', space=smem, size = 0x4, offset = 0x4, fixed_abs, tag = 'smem constant byte address 0x4 - core index']
  #allocation1 [shape = 'u32[144,128]{1,0:T(1,128)}', space=vmem, size = 0x12000, scoped, tag = 'internal scratch']
  %s0 = inlined_call_operand.hbm [shape: f32[16,32], index: 0, kind: input, shape index: {}]
  %s1 = inlined_call_operand.vmem [shape: f32[1,128], index: 1, kind: input, shape index: {}]
  %s2 = inlined_call_operand.vmem [shape: f32[1,128], index: 2, kind: input, shape index: {}]
  %s3 = inlined_call_operand.hbm [shape: f32[16,32], index: 3, kind: output, shape index: {}]
  %s4 = sld [smem:[#allocation0]]
  $region26: #{tpu_custom_call.1} parent=0
    _
  %s6 = ssub.s32 1, %s4
  %s7 = scalar_select 0, %s6, %s4
  $region1: #{tpu_custom_call.1} parent=0
    #allocation2 [shape = 'u8[8192]{0}', space=vmem, size = 0x2000, scoped, tag = 'input window, operand 0, single buffered']
    #allocation3 [shape = 's32[1]{0}', space=sflag, size = 0x4, scoped, tag = 'scoped memory for tpu_custom_call.1']
    #allocation4 [shape = 's32[1]{0}', space=sflag, size = 0x4, scoped, tag = 'scoped memory for tpu_custom_call.1']
    #allocation5 [shape = 'u8[8192]{0}', space=vmem, size = 0x2000, scoped, tag = 'output window, operand 0, single buffered']
    %8 = vsyncpa [#allocation3], 0
    %9 = vsyncpa [#allocation4], 0
    // Predicated region
    $region2: #{tpu_custom_call.1} parent=1 // pred_check
      _
    $region3: #{tpu_custom_call.1} parent=1 // pred_check_branch
      %11 = sbr.rel (0) target = $region5
    $region4: #{tpu_custom_call.1} parent=1 // pred_region
      %s13 = ssub.s32 256, 256
      %14 = vsyncadd [#allocation3], %s13
      %s15 = sshll.u32 [#allocation2], 4
      %s16 = int_to_ptr.vmem [resolvable:$true] %s15
      %21 = dma.hbm_to_vmem [thread:$0]  %s0, 256, %s16, [#allocation3], 128, 128, 8
    $region5: #{tpu_custom_call.1} parent=1 // pred_fallthru
      _
    // Predicated region
    $region6: #{tpu_custom_call.1} parent=1 // pred_check
      _
    $region7: #{tpu_custom_call.1} parent=1 // pred_check_branch
      %23 = sbr.rel (0) target = $region9
    $region8: #{tpu_custom_call.1} parent=1 // pred_region
      _
    $region9: #{tpu_custom_call.1} parent=1 // pred_fallthru
      _
    // Predicated region
    $region10: #{tpu_custom_call.1} parent=1 // pred_check
      _
    $region11: #{tpu_custom_call.1} parent=1 // pred_check_branch
      %25 = sbr.rel (0) target = $region13
    $region12: #{tpu_custom_call.1} parent=1 // pred_region
      _
    $region13: #{tpu_custom_call.1} parent=1 // pred_fallthru
      _
    // Predicated region
    $region14: #{tpu_custom_call.1} parent=1 // pred_check
      _
    $region15: #{tpu_custom_call.1} parent=1 // pred_check_branch
      %27 = sbr.rel (0) target = $region17
    $region16: #{tpu_custom_call.1} parent=1 // pred_region
      %28 = dma.done [#allocation3], 256
    $region17: #{tpu_custom_call.1} parent=1 // pred_fallthru
      _
    %v29 = vld [vmem:[#allocation2] sm:$0xff]
    %v30 = vld [vmem:[#allocation2 + $0x8] sm:$0xff]
    %v31 = vlaneseq
    %v32 = vand.u32 %v31, 127
    %vm33 = vcmp.lt.s32.totalorder %v32, 32
    %v34 = vsel %vm33, %v29, 0.0
    %v35 = vsel %vm33, %v30, 0.0
    %36 = vadd.xlane.f32.xlu0 %v34
    %v37 = vpop.xlane.xlu0 %36
    %38 = vadd.xlane.f32.xlu0 %v35
    %v39 = vpop.xlane.xlu0 %38
    %v40 = vmul.f32 %v37, 0.03125
    %v41 = vmul.f32 %v39, 0.03125
    %v42 = vsub.f32 %v29, %v40
    %v43 = vsub.f32 %v30, %v41
    %v44 = vsel %vm33, %v42, 0.0
    %v45 = vsel %vm33, %v43, 0.0
    %v46 = vmul.f32 %v44, %v44
    %v47 = vmul.f32 %v45, %v45
    %48 = vadd.xlane.f32.xlu0 %v46
    %v49 = vpop.xlane.xlu0 %48
    %50 = vadd.xlane.f32.xlu0 %v47
    %v51 = vpop.xlane.xlu0 %50
    %v52 = vmul.f32 %v49, 0.03125
    %v53 = vmul.f32 %v51, 0.03125
    %v54 = vadd.f32 %v52, 1e-12
    %v55 = vadd.f32 %v53, 1e-12
    %v56 = vrsqrt.pop %v54
    %v57 = vrsqrt.pop %v55
    %v58 = vmul.f32 %v44, %v56
    %v59 = vmul.f32 %v45, %v57
    %v60 = vld [vmem:[%s1] sm:$0x1]
    %v62 = vlaneseq
    %v63 = vshrl.u32 %v62, 7
    %v64 = vsub.s32 0, %v63
    %v65 = vrot.slane %v60, %v64
    %v67 = vmul.f32 %v58, %v65
    %v68 = vmul.f32 %v59, %v65
    %v69 = vld [vmem:[%s2] sm:$0x1]
    %v71 = vlaneseq
    %v72 = vshrl.u32 %v71, 7
    %v73 = vsub.s32 0, %v72
    %v74 = vrot.slane %v69, %v73
    %v76 = vadd.f32 %v67, %v74
    %v77 = vadd.f32 %v68, %v74
    %78 = vst [vmem:[#allocation5] sm:$0xff] %v76
    %79 = vst [vmem:[#allocation5 + $0x8] sm:$0xff] %v77
    // Predicated region
    $region18: #{tpu_custom_call.1} parent=1 // pred_check
      _
    $region19: #{tpu_custom_call.1} parent=1 // pred_check_branch
      %81 = sbr.rel (0) target = $region21
    $region20: #{tpu_custom_call.1} parent=1 // pred_region
      %s83 = ssub.s32 256, 256
      %84 = vsyncadd [#allocation4], %s83
      %s85 = sshll.u32 [#allocation5], 4
      %s86 = int_to_ptr.vmem [resolvable:$true] %s85
      %91 = dma.vmem_to_hbm [thread:$0]  %s86, 256, %s3, [#allocation4], 128, 128, 8
    $region21: #{tpu_custom_call.1} parent=1 // pred_fallthru
      _
    // Predicated region
    $region22: #{tpu_custom_call.1} parent=1 // pred_check
      _
    $region23: #{tpu_custom_call.1} parent=1 // pred_check_branch
      %93 = sbr.rel (0) target = $region25
    $region24: #{tpu_custom_call.1} parent=1 // pred_region
      %94 = dma.done [#allocation4], 256
    $region25: #{tpu_custom_call.1} parent=1 // pred_fallthru
      _
    %95 = vsyncpa [#allocation3], 1
    %96 = vsyncpa [#allocation4], 1

</llo_original>
